<compile_context>
chip_gen: v7x
topology: tpu7x:2x2x1
jax: 0.10.0
libtpu: 0.0.40
codegen_flags: <defaults>
</compile_context>

<pallas_src>
import functools

import jax
import jax.numpy as jnp
from jax.experimental import pallas as pl
from jax.experimental.pallas import tpu as pltpu

LANES = 128  # lane width; probabilities are stored lane-dense and sliced after.


def _dnn_kernel(num_hidden, x_ref, y_ref, *refs):
    """Fused MLP -> sigmoid -> binary_cross_entropy.

    refs = [W_in, b_in] + [W_h, b_h] * num_hidden + [w_out, b_out]
           + [probs_out_ref, loss_out_ref]
    """
    *p, probs_ref, loss_ref = refs

    h = x_ref[...]                                            # (B, in_dim) f32
    # Linear + ReLU stack on the MXU (bf16 operands, f32 accumulation).
    for i in range(1 + num_hidden):                           # static unroll
        w_ref, b_ref = p[2 * i], p[2 * i + 1]
        h = jnp.dot(h.astype(w_ref.dtype), w_ref[...],
                    preferred_element_type=jnp.float32) + b_ref[...]
        h = jnp.maximum(h, 0.0)                               # ReLU

    # Final Linear(out_dim, 1): an N=1 matmul wastes an MXU pass, so do it on
    # the VPU as elementwise multiply + lane reduction.
    w_out_ref, b_out_ref = p[-2], p[-1]
    logits = jnp.sum(h * w_out_ref[...], axis=-1, keepdims=True) + b_out_ref[...]
    probs = jax.nn.sigmoid(logits)                            # (B, 1)

    # F.binary_cross_entropy (mean reduction); torch clamps log() at -100.
    y = y_ref[...]                                            # (B, 1)
    log_p = jnp.maximum(jnp.log(probs), -100.0)
    log_1mp = jnp.maximum(jnp.log(1.0 - probs), -100.0)
    bce = -(y * log_p + (1.0 - y) * log_1mp)
    loss_ref[...] = jnp.sum(bce, axis=(0, 1), keepdims=True) * (1.0 / bce.size)

    # Lane-dense store of the probabilities; wrapper slices back to (B, 1).
    probs_ref[...] = jnp.broadcast_to(probs, probs_ref.shape)


def dnn_forward(features, labels, params):
    """features: (B, in_dim) f32, labels: (B, 1) f32 -> (scalar loss, probs (B, 1))."""
    batch = features.shape[0]
    num_hidden = len(params["hidden"])                        # = deepth - 2 (static)

    flat = [params["w_in"], params["b_in"]]
    for w, b in params["hidden"]:
        flat += [w, b]
    flat += [params["w_out"], params["b_out"]]

    vmem = pl.BlockSpec(memory_space=pltpu.MemorySpace.VMEM)  # whole arrays, resident
    probs_pad, loss = pl.pallas_call(
        functools.partial(_dnn_kernel, num_hidden),
        out_shape=(
            jax.ShapeDtypeStruct((batch, LANES), jnp.float32),   # lane-dense probs
            jax.ShapeDtypeStruct((1, 1), jnp.float32),           # mean BCE loss
        ),
        in_specs=[vmem] * (2 + len(flat)),
        out_specs=(vmem, vmem),
    )(features, labels, *flat)
    return loss[0, 0], probs_pad[:, :1]


def init_params(key, in_dim, out_dim, deepth=3):
    """deepth Linear layers: in->out, (deepth-2)x out->out, out->1 (matches _construct_DNN)."""
    num_hidden = deepth - 2
    keys = jax.random.split(key, 2 * deepth)
    scale = 0.1

    def w(k, shape, dtype):
        return (jax.random.normal(k, shape, jnp.float32) * scale).astype(dtype)

    hidden = tuple(
        (w(keys[2 + 2 * i], (out_dim, out_dim), jnp.bfloat16),   # MXU operand -> bf16
         w(keys[3 + 2 * i], (1, out_dim), jnp.float32))
        for i in range(num_hidden)
    )
    return {
        "w_in": w(keys[0], (in_dim, out_dim), jnp.bfloat16),     # MXU operand -> bf16
        "b_in": w(keys[1], (1, out_dim), jnp.float32),
        "hidden": hidden,
        "w_out": w(keys[-2], (1, out_dim), jnp.float32),         # VPU path stays f32
        "b_out": w(keys[-1], (1, 1), jnp.float32),
    }


if __name__ == "__main__":
    IN_DIM, OUT_DIM, DEEPTH = 128, 128, 3     # lane-aligned hidden dims
    BATCH = 8                                 # sublane-aligned batch

    key = jax.random.PRNGKey(0)
    k_params, k_feat, k_lab = jax.random.split(key, 3)

    params = init_params(k_params, IN_DIM, OUT_DIM, DEEPTH)
    features = jax.random.normal(k_feat, (BATCH, IN_DIM), jnp.float32)
    labels = jax.random.bernoulli(k_lab, 0.5, (BATCH, 1)).astype(jnp.float32)

    loss, probs = jax.jit(dnn_forward)(features, labels, params)
    jax.block_until_ready((loss, probs))

    assert probs.shape == (BATCH, 1) and probs.dtype == jnp.float32
    assert loss.shape == () and loss.dtype == jnp.float32
    assert bool(jnp.isfinite(loss))
    assert bool(jnp.all((probs >= 0.0) & (probs <= 1.0)))
    print("KERNEL_OK")
</pallas_src>

<mosaic_0001>
module attributes {stable_mosaic.version = 11 : i64} {
  func.func @_dnn_kernel(%arg0: memref<8x128xf32, #tpu.memory_space<vmem>>, %arg1: memref<8x1xf32, #tpu.memory_space<vmem>>, %arg2: memref<128x128xbf16, #tpu.memory_space<vmem>>, %arg3: memref<1x128xf32, #tpu.memory_space<vmem>>, %arg4: memref<128x128xbf16, #tpu.memory_space<vmem>>, %arg5: memref<1x128xf32, #tpu.memory_space<vmem>>, %arg6: memref<1x128xf32, #tpu.memory_space<vmem>>, %arg7: memref<1x1xf32, #tpu.memory_space<vmem>>, %arg8: memref<8x128xf32, #tpu.memory_space<vmem>>, %arg9: memref<1x1xf32, #tpu.memory_space<vmem>>) attributes {dimension_semantics = [], scalar_prefetch = 0 : i64, scratch_operands = 0 : i64, tpu.core_type = #tpu.core_type<tc>} {
    %c0 = arith.constant 0 : index
    %c0_0 = arith.constant 0 : index
    %0 = vector.load %arg0[%c0, %c0_0] : memref<8x128xf32, #tpu.memory_space<vmem>>, vector<8x128xf32>
    %1 = arith.truncf %0 : vector<8x128xf32> to vector<8x128xbf16>
    %c0_1 = arith.constant 0 : index
    %c0_2 = arith.constant 0 : index
    %2 = vector.load %arg2[%c0_1, %c0_2] : memref<128x128xbf16, #tpu.memory_space<vmem>>, vector<128x128xbf16>
    %cst = arith.constant dense<0.000000e+00> : vector<8x128xf32>
    %3 = tpu.matmul %1, %2, %cst {dimension_numbers = #tpu.dot_dimension_numbers<[1], [0], [0], [1], [0, 0, 1, 1], [], []>} : vector<8x128xbf16>, vector<128x128xbf16>, vector<8x128xf32> -> vector<8x128xf32>
    %c0_3 = arith.constant 0 : index
    %c0_4 = arith.constant 0 : index
    %4 = vector.load %arg3[%c0_3, %c0_4] : memref<1x128xf32, #tpu.memory_space<vmem>>, vector<1x128xf32>
    %5 = vector.broadcast %4 : vector<1x128xf32> to vector<8x128xf32>
    %6 = arith.addf %3, %5 : vector<8x128xf32>
    %cst_5 = arith.constant 0.000000e+00 : f32
    %7 = vector.broadcast %cst_5 : f32 to vector<8x128xf32>
    %8 = arith.maximumf %6, %7 : vector<8x128xf32>
    %9 = arith.truncf %8 : vector<8x128xf32> to vector<8x128xbf16>
    %c0_6 = arith.constant 0 : index
    %c0_7 = arith.constant 0 : index
    %10 = vector.load %arg4[%c0_6, %c0_7] : memref<128x128xbf16, #tpu.memory_space<vmem>>, vector<128x128xbf16>
    %cst_8 = arith.constant dense<0.000000e+00> : vector<8x128xf32>
    %11 = tpu.matmul %9, %10, %cst_8 {dimension_numbers = #tpu.dot_dimension_numbers<[1], [0], [0], [1], [0, 0, 1, 1], [], []>} : vector<8x128xbf16>, vector<128x128xbf16>, vector<8x128xf32> -> vector<8x128xf32>
    %c0_9 = arith.constant 0 : index
    %c0_10 = arith.constant 0 : index
    %12 = vector.load %arg5[%c0_9, %c0_10] : memref<1x128xf32, #tpu.memory_space<vmem>>, vector<1x128xf32>
    %13 = vector.broadcast %12 : vector<1x128xf32> to vector<8x128xf32>
    %14 = arith.addf %11, %13 : vector<8x128xf32>
    %cst_11 = arith.constant 0.000000e+00 : f32
    %15 = vector.broadcast %cst_11 : f32 to vector<8x128xf32>
    %16 = arith.maximumf %14, %15 : vector<8x128xf32>
    %c0_12 = arith.constant 0 : index
    %c0_13 = arith.constant 0 : index
    %17 = vector.load %arg6[%c0_12, %c0_13] : memref<1x128xf32, #tpu.memory_space<vmem>>, vector<1x128xf32>
    %18 = vector.broadcast %17 : vector<1x128xf32> to vector<8x128xf32>
    %19 = arith.mulf %16, %18 : vector<8x128xf32>
    %cst_14 = arith.constant dense<0.000000e+00> : vector<8xf32>
    %20 = vector.multi_reduction <add>, %19, %cst_14 [1] : vector<8x128xf32> to vector<8xf32>
    %21 = vector.shape_cast %20 : vector<8xf32> to vector<8x1xf32>
    %c0_15 = arith.constant 0 : index
    %c0_16 = arith.constant 0 : index
    %22 = vector.load %arg7[%c0_15, %c0_16] : memref<1x1xf32, #tpu.memory_space<vmem>>, vector<1x1xf32>
    %23 = vector.broadcast %22 : vector<1x1xf32> to vector<8x1xf32>
    %24 = arith.addf %21, %23 : vector<8x1xf32>
    %25 = arith.negf %24 : vector<8x1xf32>
    %26 = math.exp %25 : vector<8x1xf32>
    %cst_17 = arith.constant 1.000000e+00 : f32
    %27 = vector.broadcast %cst_17 : f32 to vector<8x1xf32>
    %28 = arith.addf %27, %26 : vector<8x1xf32>
    %29 = arith.divf %27, %28 : vector<8x1xf32>
    %c0_18 = arith.constant 0 : index
    %c0_19 = arith.constant 0 : index
    %30 = vector.load %arg1[%c0_18, %c0_19] : memref<8x1xf32, #tpu.memory_space<vmem>>, vector<8x1xf32>
    %31 = math.log %29 : vector<8x1xf32>
    %cst_20 = arith.constant -1.000000e+02 : f32
    %32 = vector.broadcast %cst_20 : f32 to vector<8x1xf32>
    %33 = arith.maximumf %31, %32 : vector<8x1xf32>
    %cst_21 = arith.constant 1.000000e+00 : f32
    %34 = vector.broadcast %cst_21 : f32 to vector<8x1xf32>
    %35 = arith.subf %34, %29 : vector<8x1xf32>
    %36 = math.log %35 : vector<8x1xf32>
    %cst_22 = arith.constant -1.000000e+02 : f32
    %37 = vector.broadcast %cst_22 : f32 to vector<8x1xf32>
    %38 = arith.maximumf %36, %37 : vector<8x1xf32>
    %39 = arith.mulf %30, %33 : vector<8x1xf32>
    %cst_23 = arith.constant 1.000000e+00 : f32
    %40 = vector.broadcast %cst_23 : f32 to vector<8x1xf32>
    %41 = arith.subf %40, %30 : vector<8x1xf32>
    %42 = arith.mulf %41, %38 : vector<8x1xf32>
    %43 = arith.addf %39, %42 : vector<8x1xf32>
    %cst_24 = arith.constant 0.000000e+00 : f32
    %44 = vector.broadcast %cst_24 : f32 to vector<8x1xf32>
    %45 = arith.subf %44, %43 : vector<8x1xf32>
    %46 = vector.shape_cast %45 : vector<8x1xf32> to vector<1x8x1xf32>
    %cst_25 = arith.constant dense<0.000000e+00> : vector<1xf32>
    %47 = vector.multi_reduction <add>, %46, %cst_25 [1, 2] : vector<1x8x1xf32> to vector<1xf32>
    %48 = vector.shape_cast %47 : vector<1xf32> to vector<1x1x1xf32>
    %49 = vector.extract %48[0, 0, 0] : f32 from vector<1x1x1xf32>
    %50 = vector.broadcast %49 : f32 to vector<1x1xf32>
    %cst_26 = arith.constant 1.250000e-01 : f32
    %51 = vector.broadcast %cst_26 : f32 to vector<1x1xf32>
    %52 = arith.mulf %50, %51 : vector<1x1xf32>
    %c0_27 = arith.constant 0 : index
    %c0_28 = arith.constant 0 : index
    %53 = vector.load %arg9[%c0_27, %c0_28] : memref<1x1xf32, #tpu.memory_space<vmem>>, vector<1x1xf32>
    tpu.vector_store %arg9[%c0_27, %c0_28], %52 {strides = array<i32>} : memref<1x1xf32, #tpu.memory_space<vmem>>, vector<1x1xf32>,
    %54 = vector.shape_cast %29 : vector<8x1xf32> to vector<8x1xf32>
    %55 = vector.broadcast %54 : vector<8x1xf32> to vector<8x128xf32>
    %c0_29 = arith.constant 0 : index
    %c0_30 = arith.constant 0 : index
    %56 = vector.load %arg8[%c0_29, %c0_30] : memref<8x128xf32, #tpu.memory_space<vmem>>, vector<8x128xf32>
    tpu.vector_store %arg8[%c0_29, %c0_30], %55 {strides = array<i32>} : memref<8x128xf32, #tpu.memory_space<vmem>>, vector<8x128xf32>,
    return
  }
}

</mosaic_0001>

<llo_original>
// kernel: dnn_forward.1
$region0: #{dnn_forward.1}
  #allocation0 [shape = 'u32[]', space=smem, size = 0x4, offset = 0x4, fixed_abs, tag = 'smem constant byte address 0x4 - core index']
  #allocation1 [shape = 'u32[144,128]{1,0:T(1,128)}', space=vmem, size = 0x12000, scoped, tag = 'internal scratch']
  #allocation2 [shape = 'f32[1,1]{1,0:T(1,128)S(1)}', space=vmem, size = 0x200, scoped, tag = 'scoped memory for dnn_forward.1']
  %s0 = inlined_call_operand.vmem [shape: f32[8,128], index: 0, kind: input, shape index: {}]
  %s1 = inlined_call_operand.vmem [shape: f32[8,1], index: 1, kind: input, shape index: {}]
  %s2 = inlined_call_operand.hbm [shape: bf16[128,128], index: 2, kind: input, shape index: {}]
  %s3 = inlined_call_operand.vmem [shape: f32[1,128], index: 3, kind: input, shape index: {}]
  %s4 = inlined_call_operand.hbm [shape: bf16[128,128], index: 4, kind: input, shape index: {}]
  %s5 = inlined_call_operand.vmem [shape: f32[1,128], index: 5, kind: input, shape index: {}]
  %s6 = inlined_call_operand.vmem [shape: f32[1,128], index: 6, kind: input, shape index: {}]
  %s7 = inlined_call_operand.<no memory space> [shape: f32[1,1], index: 7, kind: input, shape index: {}]
  %s8 = inlined_call_operand.vmem [shape: f32[8,128], index: 8, kind: output, shape index: {0}]
  %s9 = inlined_call_operand.hbm [shape: f32[1,1], index: 9, kind: output, shape index: {1}]
  %10 = xla_tuple %s8, %s9
  %s11 = sld [smem:[#allocation0]]
  $region58: #{dnn_forward.1} parent=0
    _
  %s13 = ssub.s32 1, %s11
  %s14 = scalar_select 0, %s13, %s11
  %v15 = vstv %s7
  %16 = vst [vmem:[#allocation2] sm:$0x1] %v15
  $region1: #{dnn_forward.1} parent=0
    #allocation3 [shape = 'u8[32768]{0}', space=vmem, size = 0x8000, scoped, tag = 'input window, operand 2, single buffered']
    #allocation4 [shape = 's32[1]{0}', space=sflag, size = 0x4, scoped, tag = 'scoped memory for dnn_forward.1']
    #allocation5 [shape = 's32[1]{0}', space=sflag, size = 0x4, scoped, tag = 'scoped memory for dnn_forward.1']
    #allocation6 [shape = 'u8[32768]{0}', space=vmem, size = 0x8000, scoped, tag = 'input window, operand 4, single buffered']
    #allocation7 [shape = 's32[1]{0}', space=sflag, size = 0x4, scoped, tag = 'scoped memory for dnn_forward.1']
    #allocation8 [shape = 'u8[512]{0}', space=vmem, size = 0x400, scoped, tag = 'output window, operand 1, single buffered']
    %17 = vsyncpa [#allocation4], 0
    %18 = vsyncpa [#allocation7], 0
    %19 = vsyncpa [#allocation5], 0
    // Predicated region
    $region2: #{dnn_forward.1} parent=1 // pred_check
      _
    $region3: #{dnn_forward.1} parent=1 // pred_check_branch
      %21 = sbr.rel (0) target = $region5
    $region4: #{dnn_forward.1} parent=1 // pred_region
      _
    $region5: #{dnn_forward.1} parent=1 // pred_fallthru
      _
    // Predicated region
    $region6: #{dnn_forward.1} parent=1 // pred_check
      _
    $region7: #{dnn_forward.1} parent=1 // pred_check_branch
      %23 = sbr.rel (0) target = $region9
    $region8: #{dnn_forward.1} parent=1 // pred_region
      _
    $region9: #{dnn_forward.1} parent=1 // pred_fallthru
      _
    // Predicated region
    $region10: #{dnn_forward.1} parent=1 // pred_check
      _
    $region11: #{dnn_forward.1} parent=1 // pred_check_branch
      %25 = sbr.rel (0) target = $region13
    $region12: #{dnn_forward.1} parent=1 // pred_region
      %s27 = ssub.s32 1024, 1024
      %28 = vsyncadd [#allocation4], %s27
      %s29 = sshll.u32 [#allocation3], 4
      %s30 = int_to_ptr.vmem [resolvable:$true] %s29
      %35 = dma.hbm_to_vmem [thread:$0]  %s2, 1024, %s30, [#allocation4], 64, 64, 4
    $region13: #{dnn_forward.1} parent=1 // pred_fallthru
      _
    // Predicated region
    $region14: #{dnn_forward.1} parent=1 // pred_check
      _
    $region15: #{dnn_forward.1} parent=1 // pred_check_branch
      %37 = sbr.rel (0) target = $region17
    $region16: #{dnn_forward.1} parent=1 // pred_region
      _
    $region17: #{dnn_forward.1} parent=1 // pred_fallthru
      _
    // Predicated region
    $region18: #{dnn_forward.1} parent=1 // pred_check
      _
    $region19: #{dnn_forward.1} parent=1 // pred_check_branch
      %39 = sbr.rel (0) target = $region21
    $region20: #{dnn_forward.1} parent=1 // pred_region
      %s41 = ssub.s32 1024, 1024
      %42 = vsyncadd [#allocation7], %s41
      %s43 = sshll.u32 [#allocation6], 4
      %s44 = int_to_ptr.vmem [resolvable:$true] %s43
      %49 = dma.hbm_to_vmem [thread:$0]  %s4, 1024, %s44, [#allocation7], 64, 64, 4
    $region21: #{dnn_forward.1} parent=1 // pred_fallthru
      _
    // Predicated region
    $region22: #{dnn_forward.1} parent=1 // pred_check
      _
    $region23: #{dnn_forward.1} parent=1 // pred_check_branch
      %51 = sbr.rel (0) target = $region25
    $region24: #{dnn_forward.1} parent=1 // pred_region
      _
    $region25: #{dnn_forward.1} parent=1 // pred_fallthru
      _
    // Predicated region
    $region26: #{dnn_forward.1} parent=1 // pred_check
      _
    $region27: #{dnn_forward.1} parent=1 // pred_check_branch
      %53 = sbr.rel (0) target = $region29
    $region28: #{dnn_forward.1} parent=1 // pred_region
      _
    $region29: #{dnn_forward.1} parent=1 // pred_fallthru
      _
    // Predicated region
    $region30: #{dnn_forward.1} parent=1 // pred_check
      _
    $region31: #{dnn_forward.1} parent=1 // pred_check_branch
      %55 = sbr.rel (0) target = $region33
    $region32: #{dnn_forward.1} parent=1 // pred_region
      _
    $region33: #{dnn_forward.1} parent=1 // pred_fallthru
      _
    // Predicated region
    $region34: #{dnn_forward.1} parent=1 // pred_check
      _
    $region35: #{dnn_forward.1} parent=1 // pred_check_branch
      %57 = sbr.rel (0) target = $region37
    $region36: #{dnn_forward.1} parent=1 // pred_region
      %58 = dma.done [#allocation4], 1024
    $region37: #{dnn_forward.1} parent=1 // pred_fallthru
      _
    // Predicated region
    $region38: #{dnn_forward.1} parent=1 // pred_check
      _
    $region39: #{dnn_forward.1} parent=1 // pred_check_branch
      %60 = sbr.rel (0) target = $region41
    $region40: #{dnn_forward.1} parent=1 // pred_region
      %61 = dma.done [#allocation7], 1024
    $region41: #{dnn_forward.1} parent=1 // pred_fallthru
      _
    %v63 = vld [vmem:[%s0] sm:$0xff]
    %v64 = vpack.c.bf16 %v63, %v63
    %v65 = vld [vmem:[#allocation3] sm:$0xf]
    %v66 = vld [vmem:[#allocation3 + $0x4] sm:$0xf]
    %v67 = vld [vmem:[#allocation3 + $0x8] sm:$0xf]
    %v68 = vld [vmem:[#allocation3 + $0xc] sm:$0xf]
    %v69 = vld [vmem:[#allocation3 + $0x10] sm:$0xf]
    %v70 = vld [vmem:[#allocation3 + $0x14] sm:$0xf]
    %v71 = vld [vmem:[#allocation3 + $0x18] sm:$0xf]
    %v72 = vld [vmem:[#allocation3 + $0x1c] sm:$0xf]
    %v73 = vld [vmem:[#allocation3 + $0x20] sm:$0xf]
    %v74 = vld [vmem:[#allocation3 + $0x24] sm:$0xf]
    %v75 = vld [vmem:[#allocation3 + $0x28] sm:$0xf]
    %v76 = vld [vmem:[#allocation3 + $0x2c] sm:$0xf]
    %v77 = vld [vmem:[#allocation3 + $0x30] sm:$0xf]
    %v78 = vld [vmem:[#allocation3 + $0x34] sm:$0xf]
    %v79 = vld [vmem:[#allocation3 + $0x38] sm:$0xf]
    %v80 = vld [vmem:[#allocation3 + $0x3c] sm:$0xf]
    %v81 = vld [vmem:[%s3] sm:$0x1]
    %v83 = vlaneseq
    %v84 = vshrl.u32 %v83, 7
    %v85 = vsub.s32 0, %v84
    %v86 = vrot.slane %v81, %v85
    %v104 = vunpack.c.l.b16 %v65
    %v105 = vunpack.c.l.b16 %v66
    %v106 = vunpack.c.l.b16 %v67
    %v107 = vunpack.c.l.b16 %v68
    %v108 = vunpack.c.l.b16 %v69
    %v109 = vunpack.c.l.b16 %v70
    %v110 = vunpack.c.l.b16 %v71
    %v111 = vunpack.c.l.b16 %v72
    %v112 = vunpack.c.l.b16 %v73
    %v113 = vunpack.c.l.b16 %v74
    %v114 = vunpack.c.l.b16 %v75
    %v115 = vunpack.c.l.b16 %v76
    %v116 = vunpack.c.l.b16 %v77
    %v117 = vunpack.c.l.b16 %v78
    %v118 = vunpack.c.l.b16 %v79
    %v119 = vunpack.c.l.b16 %v80
    %v120 = vpack.c.b16 %v105, %v104
    %v121 = vpack.c.b16 %v107, %v106
    %v122 = vpack.c.b16 %v109, %v108
    %v123 = vpack.c.b16 %v111, %v110
    %v124 = vpack.c.b16 %v113, %v112
    %v125 = vpack.c.b16 %v115, %v114
    %v126 = vpack.c.b16 %v117, %v116
    %v127 = vpack.c.b16 %v119, %v118
    %136 = vmatprep.subr.bf16.mxu0 0
    %137 = vmatpush1.bf16.msra.mxu0 %v120
    %138 = vmatprep.subr.bf16.mxu0 0
    %139 = vmatpush1.bf16.msra.mxu0 %v121
    %140 = vmatprep.subr.bf16.mxu0 0
    %141 = vmatpush1.bf16.msra.mxu0 %v122
    %142 = vmatprep.subr.bf16.mxu0 0
    %143 = vmatpush1.bf16.msra.mxu0 %v123
    %144 = vmatprep.subr.bf16.mxu0 0
    %145 = vmatpush1.bf16.msra.mxu0 %v124
    %146 = vmatprep.subr.bf16.mxu0 0
    %147 = vmatpush1.bf16.msra.mxu0 %v125
    %148 = vmatprep.subr.bf16.mxu0 0
    %149 = vmatpush1.bf16.msra.mxu0 %v126
    %150 = vmatprep.subr.bf16.mxu0 0
    %151 = vmatpush1.bf16.msra.mxu0 %v127
    %152 = vmatprep.subr.bf16.mxu0 0
    %153 = vmatpush1.bf16.msra.mxu0 0
    %154 = vmatprep.subr.bf16.mxu0 0
    %155 = vmatpush1.bf16.msra.mxu0 0
    %156 = vmatprep.subr.bf16.mxu0 0
    %157 = vmatpush1.bf16.msra.mxu0 0
    %158 = vmatprep.subr.bf16.mxu0 0
    %159 = vmatpush1.bf16.msra.mxu0 0
    %160 = vmatprep.subr.bf16.mxu0 0
    %161 = vmatpush1.bf16.msra.mxu0 0
    %162 = vmatprep.subr.bf16.mxu0 0
    %163 = vmatpush1.bf16.msra.mxu0 0
    %164 = vmatprep.subr.bf16.mxu0 0
    %165 = vmatpush1.bf16.msra.mxu0 0
    %166 = vmatprep.subr.bf16.mxu0 0
    %167 = vmatpush1.bf16.msra.mxu0 0
    %168 = vmatprep.mubr.bf16.mxu0 0
    %169 = vmatmul.mubr.bf16.gmra.mrb[0].mxu0 %v64
    %v170 = vpop.f32.mrb[0].mxu0
    %v171 = vadd.f32 %v86, %v170
    %v172 = vpop.f32.mrb[0].mxu0
    %v173 = vpop.f32.mrb[0].mxu0
    %v174 = vpop.f32.mrb[0].mxu0
    %175 = vdwg.mxu0
    %v176 = vmax.f32 %v171, 0.0
    %v177 = vpack.c.bf16 %v176, %v176
    %v178 = vld [vmem:[#allocation6] sm:$0xf]
    %v179 = vld [vmem:[#allocation6 + $0x4] sm:$0xf]
    %v180 = vld [vmem:[#allocation6 + $0x8] sm:$0xf]
    %v181 = vld [vmem:[#allocation6 + $0xc] sm:$0xf]
    %v182 = vld [vmem:[#allocation6 + $0x10] sm:$0xf]
    %v183 = vld [vmem:[#allocation6 + $0x14] sm:$0xf]
    %v184 = vld [vmem:[#allocation6 + $0x18] sm:$0xf]
    %v185 = vld [vmem:[#allocation6 + $0x1c] sm:$0xf]
    %v186 = vld [vmem:[#allocation6 + $0x20] sm:$0xf]
    %v187 = vld [vmem:[#allocation6 + $0x24] sm:$0xf]
    %v188 = vld [vmem:[#allocation6 + $0x28] sm:$0xf]
    %v189 = vld [vmem:[#allocation6 + $0x2c] sm:$0xf]
    %v190 = vld [vmem:[#allocation6 + $0x30] sm:$0xf]
    %v191 = vld [vmem:[#allocation6 + $0x34] sm:$0xf]
    %v192 = vld [vmem:[#allocation6 + $0x38] sm:$0xf]
    %v193 = vld [vmem:[#allocation6 + $0x3c] sm:$0xf]
    %v194 = vld [vmem:[%s5] sm:$0x1]
    %v196 = vlaneseq
    %v197 = vshrl.u32 %v196, 7
    %v198 = vsub.s32 0, %v197
    %v199 = vrot.slane %v194, %v198
    %v217 = vunpack.c.l.b16 %v178
    %v218 = vunpack.c.l.b16 %v179
    %v219 = vunpack.c.l.b16 %v180
    %v220 = vunpack.c.l.b16 %v181
    %v221 = vunpack.c.l.b16 %v182
    %v222 = vunpack.c.l.b16 %v183
    %v223 = vunpack.c.l.b16 %v184
    %v224 = vunpack.c.l.b16 %v185
    %v225 = vunpack.c.l.b16 %v186
    %v226 = vunpack.c.l.b16 %v187
    %v227 = vunpack.c.l.b16 %v188
    %v228 = vunpack.c.l.b16 %v189
    %v229 = vunpack.c.l.b16 %v190
    %v230 = vunpack.c.l.b16 %v191
    %v231 = vunpack.c.l.b16 %v192
    %v232 = vunpack.c.l.b16 %v193
    %v233 = vpack.c.b16 %v218, %v217
    %v234 = vpack.c.b16 %v220, %v219
    %v235 = vpack.c.b16 %v222, %v221
    %v236 = vpack.c.b16 %v224, %v223
    %v237 = vpack.c.b16 %v226, %v225
    %v238 = vpack.c.b16 %v228, %v227
    %v239 = vpack.c.b16 %v230, %v229
    %v240 = vpack.c.b16 %v232, %v231
    %249 = vmatprep.subr.bf16.mxu0 0
    %250 = vmatpush1.bf16.msra.mxu0 %v233
    %251 = vmatprep.subr.bf16.mxu0 0
    %252 = vmatpush1.bf16.msra.mxu0 %v234
    %253 = vmatprep.subr.bf16.mxu0 0
    %254 = vmatpush1.bf16.msra.mxu0 %v235
    %255 = vmatprep.subr.bf16.mxu0 0
    %256 = vmatpush1.bf16.msra.mxu0 %v236
    %257 = vmatprep.subr.bf16.mxu0 0
    %258 = vmatpush1.bf16.msra.mxu0 %v237
    %259 = vmatprep.subr.bf16.mxu0 0
    %260 = vmatpush1.bf16.msra.mxu0 %v238
    %261 = vmatprep.subr.bf16.mxu0 0
    %262 = vmatpush1.bf16.msra.mxu0 %v239
    %263 = vmatprep.subr.bf16.mxu0 0
    %264 = vmatpush1.bf16.msra.mxu0 %v240
    %265 = vmatprep.subr.bf16.mxu0 0
    %266 = vmatpush1.bf16.msra.mxu0 0
    %267 = vmatprep.subr.bf16.mxu0 0
    %268 = vmatpush1.bf16.msra.mxu0 0
    %269 = vmatprep.subr.bf16.mxu0 0
    %270 = vmatpush1.bf16.msra.mxu0 0
    %271 = vmatprep.subr.bf16.mxu0 0
    %272 = vmatpush1.bf16.msra.mxu0 0
    %273 = vmatprep.subr.bf16.mxu0 0
    %274 = vmatpush1.bf16.msra.mxu0 0
    %275 = vmatprep.subr.bf16.mxu0 0
    %276 = vmatpush1.bf16.msra.mxu0 0
    %277 = vmatprep.subr.bf16.mxu0 0
    %278 = vmatpush1.bf16.msra.mxu0 0
    %279 = vmatprep.subr.bf16.mxu0 0
    %280 = vmatpush1.bf16.msra.mxu0 0
    %281 = vmatprep.mubr.bf16.mxu0 0
    %282 = vmatmul.mubr.bf16.gmra.mrb[0].mxu0 %v177
    %v283 = vpop.f32.mrb[0].mxu0
    %v284 = vadd.f32 %v199, %v283
    %v285 = vpop.f32.mrb[0].mxu0
    %v286 = vpop.f32.mrb[0].mxu0
    %v287 = vpop.f32.mrb[0].mxu0
    %288 = vdwg.mxu0
    %v289 = vmax.f32 %v284, 0.0
    %v290 = vld [vmem:[%s6] sm:$0x1]
    %v292 = vlaneseq
    %v293 = vshrl.u32 %v292, 7
    %v294 = vsub.s32 0, %v293
    %v295 = vrot.slane %v290, %v294
    %v297 = vmul.f32 %v289, %v295
    %298 = vadd.xlane.f32.xlu0 %v297
    %v299 = vpop.xlane.xlu0 %298
    %v300 = vld [vmem:[#allocation2] sm:$0x1]
    %v302 = vlaneseq
    %v303 = vshrl.u32 %v302, 7
    %v304 = vsub.s32 0, %v303
    %v305 = vrot.slane %v300, %v304
    %v307 = vadd.f32 %v299, %v305
    %v308 = vxor.u32 %v307, 2147483648
    %v309 = vmul.f32 %v308, 1.442695
    %v310 = vpow.pop %v309
    %v311 = vadd.f32 %v310, 1.0
    %v312 = vrcp.pop %v311
    %v313 = vmul.f32 1.0, %v312
    %v314 = vld [vmem:[%s1] sm:$0xff]
    %v315 = vlog2.pop %v313
    %v316 = vmul.f32 %v315, 0.6931472
    %v317 = vmax.f32 %v316, -100.0
    %v318 = vsub.f32 1.0, %v313
    %v319 = vlog2.pop %v318
    %v320 = vmul.f32 %v319, 0.6931472
    %v321 = vmax.f32 %v320, -100.0
    %v322 = vmul.f32 %v314, %v317
    %v323 = vsub.f32 1.0, %v314
    %v324 = vmul.f32 %v323, %v321
    %v325 = vadd.f32 %v322, %v324
    %v326 = vsub.f32 0.0, %v325
    %vm327 = vcmask 7168
    %v328 = vsel %vm327, %v326, 0.0
    %329 = vadd.xlane.f32.xlu0 %v328
    %v330 = vpop.xlane.xlu0 %329
    %v331 = vrot.slane %v330, 4
    %v332 = vadd.f32 %v330, %v331
    %v333 = vrot.slane %v332, 2
    %v334 = vadd.f32 %v332, %v333
    %v335 = vrot.slane %v334, 1
    %v336 = vadd.f32 %v334, %v335
    %s337 = vtos %v336
    %v338 = vstv %s337
    %v339 = vmul.f32 %v338, 0.125
    %vm340 = vcmask 0
    %341 = vst.msk [vmem:[#allocation8] sm:$0x1] %vm340, %v339
    %343 = vset.pattern.permute.xlu0 0
    %344 = vperm.xlu0 %343, %v313
    %v345 = vpop.permute.xlu0 %344
    %347 = vst [vmem:[%s8] sm:$0xff] %v345
    // Predicated region
    $region42: #{dnn_forward.1} parent=1 // pred_check
      _
    $region43: #{dnn_forward.1} parent=1 // pred_check_branch
      %349 = sbr.rel (0) target = $region45
    $region44: #{dnn_forward.1} parent=1 // pred_region
      _
    $region45: #{dnn_forward.1} parent=1 // pred_fallthru
      _
    // Predicated region
    $region46: #{dnn_forward.1} parent=1 // pred_check
      _
    $region47: #{dnn_forward.1} parent=1 // pred_check_branch
      %351 = sbr.rel (0) target = $region49
    $region48: #{dnn_forward.1} parent=1 // pred_region
      %s353 = ssub.s32 16, 16
      %354 = vsyncadd [#allocation5], %s353
      %s356 = sshll.u32 [#allocation8], 4
      %s357 = int_to_ptr.vmem [resolvable:$true] %s356
      %359 = dma.vmem_to_hbm [thread:$0]  %s357, 16, %s9, [#allocation5]
    $region49: #{dnn_forward.1} parent=1 // pred_fallthru
      _
    // Predicated region
    $region50: #{dnn_forward.1} parent=1 // pred_check
      _
    $region51: #{dnn_forward.1} parent=1 // pred_check_branch
      %361 = sbr.rel (0) target = $region53
    $region52: #{dnn_forward.1} parent=1 // pred_region
      _
    $region53: #{dnn_forward.1} parent=1 // pred_fallthru
      _
    // Predicated region
    $region54: #{dnn_forward.1} parent=1 // pred_check
      _
    $region55: #{dnn_forward.1} parent=1 // pred_check_branch
      %363 = sbr.rel (0) target = $region57
    $region56: #{dnn_forward.1} parent=1 // pred_region
      %364 = dma.done [#allocation5], 16
    $region57: #{dnn_forward.1} parent=1 // pred_fallthru
      _
    %365 = vsyncpa [#allocation4], 1
    %366 = vsyncpa [#allocation7], 1
    %367 = vsyncpa [#allocation5], 1

</llo_original>
